<compile_context>
chip_gen: v5e
topology: v5e:2x2
jax: 0.10.0
libtpu: 0.0.40
codegen_flags: <defaults>
</compile_context>

<pallas_src>
from typing import Any, NamedTuple

import jax
import jax.numpy as jnp
from jax.experimental import pallas as pl
from jax.experimental.pallas import tpu as pltpu

EPS = 1e-5
LANE = 128
SUBLANE = 8


def _round_up(x, m):
    return ((x + m - 1) // m) * m


def _vmem_cap_bytes():
    """Per-generation VMEM budget (leave ~20% headroom for compiler scratch)."""
    try:
        cap = int(pltpu.get_tpu_info().vmem_capacity_bytes)
    except Exception:
        cap = 64 * 2 ** 20            # conservative (v7x-sized) fallback
    return int(cap * 0.8)             # ~51 MiB on v7x, ~102 MiB on v5e/v6e


class _GLUConfig(NamedTuple):
    dim_in: int
    dim_out: int
    Dp: int        # lane-padded feature dim
    Kp: int        # (possibly) padded contraction dim
    tk: int        # K block size
    nk: int        # number of K blocks
    mm_dtype: Any  # MXU operand dtype
    h_dtype: Any   # dtype of the h intermediate in HBM


def prepare_residual_glu_params(w_fc, b_fc, w_sc, b_sc, gamma, beta, *,
                                use_bf16=True, block_k=None):
    """One-time host-side fusion / padding of ResidualGLU parameters.

    Weights are expected pre-transposed to (in, out): w_fc (dim_in, 2*dim_out),
    w_sc (dim_in, dim_out).  Returns (arrays_dict, config).
    """
    dim_in, two_dout = w_fc.shape
    dim_out = w_sc.shape[1]
    assert two_dout == 2 * dim_out
    f32 = jnp.float32
    Dp = _round_up(dim_out, LANE)

    def pad_w(w):   # (dim_in, dim_out) -> (dim_in, Dp)
        return jnp.pad(w.astype(f32), ((0, 0), (0, Dp - dim_out)))

    def pad_v(v):   # (dim_out,) -> (Dp,)
        return jnp.pad(v.astype(f32), (0, Dp - dim_out))

    # Fused weight [x_proj | gate | residual], each segment lane-padded to Dp so the
    # chunk split and the output store are 128-lane aligned.
    w_fused = jnp.concatenate(
        [pad_w(w_fc[:, :dim_out]), pad_w(w_fc[:, dim_out:]), pad_w(w_sc)], axis=1)
    # b_sc is a per-feature constant on h -> training-mode BatchNorm cancels it exactly,
    # so only the x_proj / gate bias segments are kept (1/3 less bias VALU + VMEM).
    b_fused = jnp.concatenate([pad_v(b_fc[:dim_out]),
                               pad_v(b_fc[dim_out:])]).reshape(1, 2 * Dp)

    mm_dtype = jnp.bfloat16 if use_bf16 else f32
    h_dtype = jnp.bfloat16 if use_bf16 else f32
    itm_mm = jnp.dtype(mm_dtype).itemsize

    # Decide whether the fused weight stays VMEM-resident (the pipeline double-buffers it,
    # hence the 2x) or is streamed along K in 128-aligned chunks (the v7x / large-dim case).
    budget = _vmem_cap_bytes() // 2
    w_bytes = dim_in * 3 * Dp * itm_mm
    if block_k is not None:
        tk = min(int(block_k), dim_in)
    elif 2 * w_bytes <= budget:
        tk = dim_in
    else:
        tk = 512
    if tk >= dim_in:
        tk, nk, Kp = dim_in, 1, dim_in
    else:
        tk = _round_up(tk, LANE)
        nk = -(-dim_in // tk)
        Kp = nk * tk
        if Kp != dim_in:                    # zero rows contribute nothing to the matmul
            w_fused = jnp.pad(w_fused, ((0, Kp - dim_in), (0, 0)))

    arrays = dict(w_fused=w_fused.astype(mm_dtype), b_fused=b_fused,
                  gamma=pad_v(gamma), beta=pad_v(beta))
    cfg = _GLUConfig(dim_in=dim_in, dim_out=dim_out, Dp=Dp, Kp=Kp, tk=tk, nk=nk,
                     mm_dtype=mm_dtype, h_dtype=h_dtype)
    return arrays, cfg


def _make_pass1_kernel(nb, nk, TB, Dp, rows_last, mm_dtype):
    """Fused matmul + GLU + residual; per-batch-tile BN partial sums."""
    need_mask = rows_last != TB
    mm_dt = jnp.dtype(mm_dtype)

    def finalize(y, b_ref, h_ref, stats_ref):
        xg = y[:, :2 * Dp] + b_ref[...]                     # bias only on x_proj/gate
        x_proj, gate = xg[:, :Dp], xg[:, Dp:]
        residual = y[:, 2 * Dp:]
        h = x_proj * jax.nn.sigmoid(gate) + residual        # (TB, Dp) f32
        h_ref[...] = h.astype(h_ref.dtype)                  # bf16 h on the default path

        def write_stats(hm):
            # Two lane-aligned row stores (no sublane-axis concatenate).
            stats_ref[0, 0:1, :] = jnp.sum(hm, axis=0, keepdims=True)
            stats_ref[0, 1:2, :] = jnp.sum(hm * hm, axis=0, keepdims=True)

        if need_mask:
            # Padded batch rows only exist in the LAST tile; keep the mask out of the hot loop.
            @pl.when(pl.program_id(0) == nb - 1)
            def _():
                row = jax.lax.broadcasted_iota(jnp.int32, (TB, 1), 0)
                write_stats(jnp.where(row < rows_last, h, 0.0))

            @pl.when(pl.program_id(0) < nb - 1)
            def _():
                write_stats(h)
        else:
            write_stats(h)

    def mm(x_ref, w_ref):
        x = x_ref[...]
        if x.dtype != mm_dt:
            x = x.astype(mm_dt)          # cast the tile in VMEM (no extra HBM pass over x)
        return jnp.dot(x, w_ref[...], preferred_element_type=jnp.float32)

    if nk == 1:
        def kernel(x_ref, w_ref, b_ref, h_ref, stats_ref):
            finalize(mm(x_ref, w_ref), b_ref, h_ref, stats_ref)
        return kernel

    def kernel(x_ref, w_ref, b_ref, h_ref, stats_ref, acc_ref):
        k = pl.program_id(1)

        @pl.when(k == 0)
        def _():
            acc_ref[...] = jnp.zeros_like(acc_ref)

        acc_ref[...] += mm(x_ref, w_ref)

        @pl.when(k == nk - 1)
        def _():
            finalize(acc_ref[...], b_ref, h_ref, stats_ref)

    return kernel


def _bn_apply_kernel(h_ref, scale_ref, shift_ref, out_ref):
    """out = h * scale + shift  (scale/shift fold mean, var, gamma, beta)."""
    h = h_ref[...].astype(jnp.float32)
    out_ref[...] = (h * scale_ref[...] + shift_ref[...]).astype(out_ref.dtype)


def residual_glu(x, arrays, cfg: _GLUConfig, *, block_rows=512):
    """x: (B, dim_in).  arrays/cfg from prepare_residual_glu_params.
    Returns (B, dim_out) in x.dtype (training-mode BatchNorm)."""
    B, dim_in = x.shape
    assert dim_in == cfg.dim_in
    Dp, Kp, tk, nk = cfg.Dp, cfg.Kp, cfg.tk, cfg.nk
    f32 = jnp.float32
    itm_mm = jnp.dtype(cfg.mm_dtype).itemsize
    itm_h = jnp.dtype(cfg.h_dtype).itemsize

    # Batch tile: multiple of 8; aim for >= 2 tiles so both v7x TensorCores get work.
    block_rows = _round_up(block_rows, SUBLANE)
    TB = min(block_rows, max(SUBLANE, _round_up((B + 1) // 2, SUBLANE)))
    nb = -(-B // TB)
    B_pad = nb * TB
    rows_last = B - (nb - 1) * TB

    xp = x.astype(f32)
    if B_pad != B or Kp != dim_in:
        xp = jnp.pad(xp, ((0, B_pad - B), (0, Kp - dim_in)))

    vmem_cap = _vmem_cap_bytes()

    # ---- pass 1: fused matmul + GLU + residual + BN partial sums -----------------
    if nk == 1:
        grid = (nb,)
        in_specs = [
            pl.BlockSpec((TB, Kp), lambda i: (i, 0)),          # x tile (pipelined)
            pl.BlockSpec((Kp, 3 * Dp), lambda i: (0, 0)),      # fused weight (VMEM-resident)
            pl.BlockSpec((1, 2 * Dp), lambda i: (0, 0)),       # fused bias (resident)
        ]
        out_specs = (
            pl.BlockSpec((TB, Dp), lambda i: (i, 0)),          # h tile
            pl.BlockSpec((1, 2, Dp), lambda i: (i, 0, 0)),     # per-tile (sum, sumsq)
        )
        scratch = ()
        semantics = ("parallel",)
    else:
        grid = (nb, nk)
        in_specs = [
            pl.BlockSpec((TB, tk), lambda i, k: (i, k)),       # x K-chunk
            pl.BlockSpec((tk, 3 * Dp), lambda i, k: (k, 0)),   # weight streamed along K
            pl.BlockSpec((1, 2 * Dp), lambda i, k: (0, 0)),
        ]
        out_specs = (
            pl.BlockSpec((TB, Dp), lambda i, k: (i, 0)),
            pl.BlockSpec((1, 2, Dp), lambda i, k: (i, 0, 0)),
        )
        scratch = (pltpu.VMEM((TB, 3 * Dp), f32),)             # K-reduction accumulator
        semantics = ("parallel", "arbitrary")

    tk_eff = tk if nk > 1 else Kp
    vmem_need = (2 * tk_eff * 3 * Dp * itm_mm          # weight block(s), pipeline-buffered
                 + 2 * 2 * Dp * 4                      # bias
                 + 2 * TB * tk_eff * 4                 # x tiles (f32 in VMEM)
                 + 2 * TB * Dp * itm_h                 # h tiles
                 + 2 * 2 * Dp * 4                      # stats tiles
                 + (TB * 3 * Dp * 4 if nk > 1 else 0)  # accumulator scratch
                 + 2 * TB * 3 * Dp * 4)                # f32 intermediates headroom
    cp1 = pltpu.CompilerParams(
        dimension_semantics=semantics,
        vmem_limit_bytes=int(min(max(int(1.25 * vmem_need), 32 * 2 ** 20), vmem_cap)))

    w_bytes = Kp * 3 * Dp * itm_mm
    cost1 = pl.CostEstimate(
        flops=2 * B_pad * Kp * 3 * Dp,
        transcendentals=B_pad * Dp,
        bytes_accessed=int(B_pad * Kp * 4 + (nb if nk > 1 else 1) * w_bytes
                           + B_pad * Dp * itm_h + nb * 2 * Dp * 4))

    h, stats = pl.pallas_call(
        _make_pass1_kernel(nb, nk, TB, Dp, rows_last, cfg.mm_dtype),
        out_shape=(jax.ShapeDtypeStruct((B_pad, Dp), cfg.h_dtype),
                   jax.ShapeDtypeStruct((nb, 2, Dp), f32)),
        grid_spec=pltpu.PrefetchScalarGridSpec(
            num_scalar_prefetch=0,
            grid=grid,
            in_specs=in_specs,
            out_specs=out_specs,
            scratch_shapes=scratch),
        compiler_params=cp1,
        cost_estimate=cost1,
    )(xp, arrays["w_fused"], arrays["b_fused"])

    # ---- combine partials & fold gamma/beta (tiny (nb,2,Dp) XLA reduction) -------
    sums = jnp.sum(stats, axis=0)                       # (2, Dp), f32 partials
    mean = sums[0] / B
    var = sums[1] / B - mean * mean                     # biased variance
    scale_v = arrays["gamma"] * jax.lax.rsqrt(var + EPS)
    shift_v = arrays["beta"] - mean * scale_v
    scale = scale_v.reshape(1, Dp)
    shift = shift_v.reshape(1, Dp)

    # ---- pass 2: lane-dense elementwise normalization ----------------------------
    # (For small B*Dp this could be fused into pass 1 with a VMEM-resident h; kept as a
    #  separate mem-bound sweep here for generality.)
    TB2 = TB
    for cand in (2048, 1024):                           # larger row tile when it divides evenly
        if cand > TB2 and B_pad % cand == 0:
            TB2 = cand
            break
    nb2 = B_pad // TB2
    out_dtype = x.dtype
    vmem2 = 2 * TB2 * Dp * (itm_h + jnp.dtype(out_dtype).itemsize) + 8 * Dp * 4
    cp2 = pltpu.CompilerParams(
        dimension_semantics=("parallel",),
        vmem_limit_bytes=int(min(max(2 * vmem2, 16 * 2 ** 20), vmem_cap)))
    alias = {0: 0} if jnp.dtype(cfg.h_dtype) == jnp.dtype(out_dtype) else {}

    out = pl.pallas_call(
        _bn_apply_kernel,
        out_shape=jax.ShapeDtypeStruct((B_pad, Dp), out_dtype),
        grid_spec=pltpu.PrefetchScalarGridSpec(
            num_scalar_prefetch=0,
            grid=(nb2,),
            in_specs=[
                pl.BlockSpec((TB2, Dp), lambda i: (i, 0)),
                pl.BlockSpec((1, Dp), lambda i: (0, 0)),
                pl.BlockSpec((1, Dp), lambda i: (0, 0)),
            ],
            out_specs=pl.BlockSpec((TB2, Dp), lambda i: (i, 0))),
        compiler_params=cp2,
        input_output_aliases=alias,
    )(h, scale, shift)

    # Strip batch and lane padding.
    return out[:B, :cfg.dim_out]


def residual_glu_ref(x, w_fc, b_fc, w_sc, b_sc, gamma, beta):
    """Pure-JAX reference mirroring the PyTorch forward (training-mode BN)."""
    y = x @ w_fc + b_fc
    dout = w_sc.shape[1]
    x_proj, gate = y[:, :dout], y[:, dout:]
    residual = x @ w_sc + b_sc
    h = x_proj * jax.nn.sigmoid(gate) + residual
    mean = jnp.mean(h, axis=0, keepdims=True)
    var = jnp.mean((h - mean) ** 2, axis=0, keepdims=True)
    return gamma * (h - mean) / jnp.sqrt(var + EPS) + beta


def _make_inputs(key, B, dim_in, dim_out):
    kx, kwf, kbf, kws, kbs, kg, kb = jax.random.split(key, 7)
    x = jax.random.normal(kx, (B, dim_in), dtype=jnp.float32)
    lim = 1.0 / jnp.sqrt(jnp.float32(dim_in))
    w_fc = jax.random.uniform(kwf, (dim_in, 2 * dim_out), jnp.float32, -lim, lim)
    b_fc = jax.random.uniform(kbf, (2 * dim_out,), jnp.float32, -lim, lim)
    w_sc = jax.random.uniform(kws, (dim_in, dim_out), jnp.float32, -lim, lim)
    b_sc = jax.random.uniform(kbs, (dim_out,), jnp.float32, -lim, lim)
    gamma = 1.0 + 0.1 * jax.random.normal(kg, (dim_out,), jnp.float32)
    beta = 0.1 * jax.random.normal(kb, (dim_out,), jnp.float32)
    return x, w_fc, b_fc, w_sc, b_sc, gamma, beta


if __name__ == "__main__":
    key = jax.random.PRNGKey(0)
    k1, k2, k3 = jax.random.split(key, 3)

    # --- 1) small module-like shape (single batch tile) ---------------------------
    x, w_fc, b_fc, w_sc, b_sc, gamma, beta = _make_inputs(k1, 8, 32, 16)
    ref = residual_glu_ref(x, w_fc, b_fc, w_sc, b_sc, gamma, beta)

    # default path: bf16 MXU operands, bf16 h, f32 accumulation
    arrays, cfg = prepare_residual_glu_params(w_fc, b_fc, w_sc, b_sc, gamma, beta)
    fwd = jax.jit(lambda xx, pp: residual_glu(xx, pp, cfg))
    out = jax.block_until_ready(fwd(x, arrays))
    assert out.shape == (8, 16)
    assert jnp.allclose(out, ref, atol=1e-1, rtol=1e-1), "bf16 path mismatch vs reference"

    # f32 path — tight tolerance
    arrays32, cfg32 = prepare_residual_glu_params(
        w_fc, b_fc, w_sc, b_sc, gamma, beta, use_bf16=False)
    fwd32 = jax.jit(lambda xx, pp: residual_glu(xx, pp, cfg32))
    out32 = jax.block_until_ready(fwd32(x, arrays32))
    assert jnp.allclose(out32, ref, atol=1e-4, rtol=1e-4), "f32 path mismatch vs reference"

    # --- 2) multi-tile batch with padding / last-tile mask (B % TB != 0) ----------
    x2, *p2 = _make_inputs(k2, 300, 96, 48)
    ref2 = residual_glu_ref(x2, *p2)
    a2, c2 = prepare_residual_glu_params(*p2, use_bf16=False)
    fwd2 = jax.jit(lambda xx, pp: residual_glu(xx, pp, c2, block_rows=128))
    out2 = jax.block_until_ready(fwd2(x2, a2))
    assert out2.shape == (300, 48)
    assert jnp.allclose(out2, ref2, atol=1e-3, rtol=1e-3), "tiled mismatch vs reference"

    # --- 3) K-streamed weight path (dim_in padded to a multiple of the K block) ---
    x3, *p3 = _make_inputs(k3, 64, 200, 64)
    ref3 = residual_glu_ref(x3, *p3)
    a3, c3 = prepare_residual_glu_params(*p3, use_bf16=False, block_k=128)
    fwd3 = jax.jit(lambda xx, pp: residual_glu(xx, pp, c3))
    out3 = jax.block_until_ready(fwd3(x3, a3))
    assert out3.shape == (64, 64)
    assert jnp.allclose(out3, ref3, atol=1e-3, rtol=1e-3), "K-tiled mismatch vs reference"

    print("KERNEL_OK")
</pallas_src>

<mosaic_0001>
module attributes {stable_mosaic.version = 11 : i64} {
  func.func @_bn_apply_kernel(%arg0: i32, %arg1: memref<8x128xbf16, #tpu.memory_space<vmem>>, %arg2: memref<1x128xf32, #tpu.memory_space<vmem>>, %arg3: memref<1x128xf32, #tpu.memory_space<vmem>>, %arg4: memref<8x128xf32, #tpu.memory_space<vmem>>) attributes {dimension_semantics = [#tpu.dimension_semantics<parallel>], iteration_bounds = array<i64: 1>, scalar_prefetch = 0 : i64, scratch_operands = 0 : i64, tpu.core_type = #tpu.core_type<tc>, window_params = [{transform_indices = @transform_0, window_bounds = array<i64: 8, 128>}, {pipeline_mode = #tpu.pipeline_mode<synchronous>, transform_indices = @transform_1, window_bounds = array<i64: 1, 128>}, {pipeline_mode = #tpu.pipeline_mode<synchronous>, transform_indices = @transform_2, window_bounds = array<i64: 1, 128>}, {transform_indices = @transform_3, window_bounds = array<i64: 8, 128>}]} {
    %c0 = arith.constant 0 : index
    %c0_0 = arith.constant 0 : index
    %0 = vector.load %arg1[%c0, %c0_0] : memref<8x128xbf16, #tpu.memory_space<vmem>>, vector<8x128xbf16>
    %1 = arith.extf %0 : vector<8x128xbf16> to vector<8x128xf32>
    %c0_1 = arith.constant 0 : index
    %c0_2 = arith.constant 0 : index
    %2 = vector.load %arg2[%c0_1, %c0_2] : memref<1x128xf32, #tpu.memory_space<vmem>>, vector<1x128xf32>
    %3 = vector.broadcast %2 : vector<1x128xf32> to vector<8x128xf32>
    %4 = arith.mulf %1, %3 : vector<8x128xf32>
    %c0_3 = arith.constant 0 : index
    %c0_4 = arith.constant 0 : index
    %5 = vector.load %arg3[%c0_3, %c0_4] : memref<1x128xf32, #tpu.memory_space<vmem>>, vector<1x128xf32>
    %6 = vector.broadcast %5 : vector<1x128xf32> to vector<8x128xf32>
    %7 = arith.addf %4, %6 : vector<8x128xf32>
    %c0_5 = arith.constant 0 : index
    %c0_6 = arith.constant 0 : index
    %8 = vector.load %arg4[%c0_5, %c0_6] : memref<8x128xf32, #tpu.memory_space<vmem>>, vector<8x128xf32>
    tpu.vector_store %arg4[%c0_5, %c0_6], %7 {strides = array<i32>} : memref<8x128xf32, #tpu.memory_space<vmem>>, vector<8x128xf32>,
    return
  }
  func.func @transform_0(%arg0: i32) -> (i32, i32) {
    %c0_i32 = arith.constant 0 : i32
    %c0_i32_0 = arith.constant 0 : i32
    return %arg0, %c0_i32 : i32, i32
  }
  func.func @transform_1(%arg0: i32) -> (i32, i32) {
    %c0_i32 = arith.constant 0 : i32
    %c0_i32_0 = arith.constant 0 : i32
    %c0_i32_1 = arith.constant 0 : i32
    return %c0_i32, %c0_i32_0 : i32, i32
  }
  func.func @transform_2(%arg0: i32) -> (i32, i32) {
    %c0_i32 = arith.constant 0 : i32
    %c0_i32_0 = arith.constant 0 : i32
    %c0_i32_1 = arith.constant 0 : i32
    return %c0_i32, %c0_i32_0 : i32, i32
  }
  func.func @transform_3(%arg0: i32) -> (i32, i32) {
    %c0_i32 = arith.constant 0 : i32
    %c0_i32_0 = arith.constant 0 : i32
    return %arg0, %c0_i32 : i32, i32
  }
}

module attributes {stable_mosaic.version = 11 : i64} {
  func.func @kernel(%arg0: i32, %arg1: memref<8x32xf32, #tpu.memory_space<vmem>>, %arg2: memref<32x384xbf16, #tpu.memory_space<vmem>>, %arg3: memref<1x256xf32, #tpu.memory_space<vmem>>, %arg4: memref<8x128xbf16, #tpu.memory_space<vmem>>, %arg5: memref<1x2x128xf32, #tpu.memory_space<vmem>>) attributes {dimension_semantics = [#tpu.dimension_semantics<parallel>], iteration_bounds = array<i64: 1>, scalar_prefetch = 0 : i64, scratch_operands = 0 : i64, tpu.core_type = #tpu.core_type<tc>, window_params = [{transform_indices = @transform_0, window_bounds = array<i64: 8, 32>}, {pipeline_mode = #tpu.pipeline_mode<synchronous>, transform_indices = @transform_1, window_bounds = array<i64: 32, 384>}, {pipeline_mode = #tpu.pipeline_mode<synchronous>, transform_indices = @transform_2, window_bounds = array<i64: 1, 256>}, {transform_indices = @transform_3, window_bounds = array<i64: 8, 128>}, {transform_indices = @transform_4, window_bounds = array<i64: 1, 2, 128>}]} {
    %c0 = arith.constant 0 : index
    %c0_0 = arith.constant 0 : index
    %0 = vector.load %arg1[%c0, %c0_0] : memref<8x32xf32, #tpu.memory_space<vmem>>, vector<8x32xf32>
    %1 = arith.truncf %0 : vector<8x32xf32> to vector<8x32xbf16>
    %c0_1 = arith.constant 0 : index
    %c0_2 = arith.constant 0 : index
    %2 = vector.load %arg2[%c0_1, %c0_2] : memref<32x384xbf16, #tpu.memory_space<vmem>>, vector<32x384xbf16>
    %cst = arith.constant dense<0.000000e+00> : vector<8x384xf32>
    %3 = tpu.matmul %1, %2, %cst {dimension_numbers = #tpu.dot_dimension_numbers<[1], [0], [0], [1], [0, 0, 1, 1], [], []>} : vector<8x32xbf16>, vector<32x384xbf16>, vector<8x384xf32> -> vector<8x384xf32>
    %4 = vector.extract_strided_slice %3 {offsets = [0, 0], sizes = [8, 256], strides = [1, 1]} : vector<8x384xf32> to vector<8x256xf32>
    %c0_3 = arith.constant 0 : index
    %c0_4 = arith.constant 0 : index
    %5 = vector.load %arg3[%c0_3, %c0_4] : memref<1x256xf32, #tpu.memory_space<vmem>>, vector<1x256xf32>
    %6 = vector.broadcast %5 : vector<1x256xf32> to vector<8x256xf32>
    %7 = arith.addf %4, %6 : vector<8x256xf32>
    %8 = vector.extract_strided_slice %7 {offsets = [0, 0], sizes = [8, 128], strides = [1, 1]} : vector<8x256xf32> to vector<8x128xf32>
    %9 = vector.extract_strided_slice %7 {offsets = [0, 128], sizes = [8, 128], strides = [1, 1]} : vector<8x256xf32> to vector<8x128xf32>
    %10 = vector.extract_strided_slice %3 {offsets = [0, 256], sizes = [8, 128], strides = [1, 1]} : vector<8x384xf32> to vector<8x128xf32>
    %11 = arith.negf %9 : vector<8x128xf32>
    %12 = math.exp %11 : vector<8x128xf32>
    %cst_5 = arith.constant 1.000000e+00 : f32
    %13 = vector.broadcast %cst_5 : f32 to vector<8x128xf32>
    %14 = arith.addf %13, %12 : vector<8x128xf32>
    %15 = arith.divf %13, %14 : vector<8x128xf32>
    %16 = arith.mulf %8, %15 : vector<8x128xf32>
    %17 = arith.addf %16, %10 : vector<8x128xf32>
    %18 = arith.truncf %17 : vector<8x128xf32> to vector<8x128xbf16>
    %c0_6 = arith.constant 0 : index
    %c0_7 = arith.constant 0 : index
    %19 = vector.load %arg4[%c0_6, %c0_7] : memref<8x128xbf16, #tpu.memory_space<vmem>>, vector<8x128xbf16>
    tpu.vector_store %arg4[%c0_6, %c0_7], %18 {strides = array<i32>} : memref<8x128xbf16, #tpu.memory_space<vmem>>, vector<8x128xbf16>,
    %cst_8 = arith.constant dense<0.000000e+00> : vector<128xf32>
    %20 = vector.multi_reduction <add>, %17, %cst_8 [0] : vector<8x128xf32> to vector<128xf32>
    %21 = vector.shape_cast %20 : vector<128xf32> to vector<1x128xf32>
    %c0_9 = arith.constant 0 : index
    %c0_10 = arith.constant 0 : index
    %c0_11 = arith.constant 0 : index
    %22 = vector.load %arg5[%c0_9, %c0_10, %c0_11] : memref<1x2x128xf32, #tpu.memory_space<vmem>>, vector<1x1x128xf32>
    %23 = vector.shape_cast %22 : vector<1x1x128xf32> to vector<1x128xf32>
    %24 = vector.shape_cast %21 : vector<1x128xf32> to vector<1x1x128xf32>
    tpu.vector_store %arg5[%c0_9, %c0_10, %c0_11], %24 {strides = array<i32>} : memref<1x2x128xf32, #tpu.memory_space<vmem>>, vector<1x1x128xf32>,
    %25 = arith.mulf %17, %17 : vector<8x128xf32>
    %cst_12 = arith.constant dense<0.000000e+00> : vector<128xf32>
    %26 = vector.multi_reduction <add>, %25, %cst_12 [0] : vector<8x128xf32> to vector<128xf32>
    %27 = vector.shape_cast %26 : vector<128xf32> to vector<1x128xf32>
    %c0_13 = arith.constant 0 : index
    %c1 = arith.constant 1 : index
    %c0_14 = arith.constant 0 : index
    %28 = vector.load %arg5[%c0_13, %c1, %c0_14] : memref<1x2x128xf32, #tpu.memory_space<vmem>>, vector<1x1x128xf32>
    %29 = vector.shape_cast %28 : vector<1x1x128xf32> to vector<1x128xf32>
    %30 = vector.shape_cast %27 : vector<1x128xf32> to vector<1x1x128xf32>
    tpu.vector_store %arg5[%c0_13, %c1, %c0_14], %30 {strides = array<i32>} : memref<1x2x128xf32, #tpu.memory_space<vmem>>, vector<1x1x128xf32>,
    return
  }
  func.func @transform_0(%arg0: i32) -> (i32, i32) {
    %c0_i32 = arith.constant 0 : i32
    %c0_i32_0 = arith.constant 0 : i32
    return %arg0, %c0_i32 : i32, i32
  }
  func.func @transform_1(%arg0: i32) -> (i32, i32) {
    %c0_i32 = arith.constant 0 : i32
    %c0_i32_0 = arith.constant 0 : i32
    %c0_i32_1 = arith.constant 0 : i32
    return %c0_i32, %c0_i32_0 : i32, i32
  }
  func.func @transform_2(%arg0: i32) -> (i32, i32) {
    %c0_i32 = arith.constant 0 : i32
    %c0_i32_0 = arith.constant 0 : i32
    %c0_i32_1 = arith.constant 0 : i32
    return %c0_i32, %c0_i32_0 : i32, i32
  }
  func.func @transform_3(%arg0: i32) -> (i32, i32) {
    %c0_i32 = arith.constant 0 : i32
    %c0_i32_0 = arith.constant 0 : i32
    return %arg0, %c0_i32 : i32, i32
  }
  func.func @transform_4(%arg0: i32) -> (i32, i32, i32) {
    %c0_i32 = arith.constant 0 : i32
    %c0_i32_0 = arith.constant 0 : i32
    %c0_i32_1 = arith.constant 0 : i32
    return %arg0, %c0_i32, %c0_i32_0 : i32, i32, i32
  }
}

</mosaic_0001>

<llo_original>
// kernel: _lambda_.3
$region0: #{_lambda_.3}
  #allocation0 [shape = 'u32[]', space=smem, size = 0x4, offset = 0x4, fixed_abs, tag = 'smem constant byte address 0x4 - core index']
  #allocation1 [shape = 'u32[72,128]{1,0:T(1,128)}', space=vmem, size = 0x9000, scoped, tag = 'internal scratch']
  %s0 = inlined_call_operand.vmem [shape: bf16[8,128], index: 0, kind: input, shape index: {}]
  %s1 = inlined_call_operand.vmem [shape: f32[1,128], index: 1, kind: input, shape index: {}]
  %s2 = inlined_call_operand.vmem [shape: f32[1,128], index: 2, kind: input, shape index: {}]
  %s3 = inlined_call_operand.hbm [shape: f32[8,128], index: 3, kind: output, shape index: {}]
  %s4 = sld [smem:[#allocation0]]
  $region22: #{_lambda_.3} parent=0
    _
  %s6 = ssub.s32 1, %s4
  %s7 = scalar_select 0, %s6, %s4
  $region1: #{_lambda_.3} parent=0
    #allocation2 [shape = 'u8[4096]{0}', space=vmem, size = 0x1000, scoped, tag = 'output window, operand 0, single buffered']
    #allocation3 [shape = 's32[1]{0}', space=sflag, size = 0x4, scoped, tag = 'scoped memory for _lambda_.3']
    %8 = vsyncpa [#allocation3], 0
    // Predicated region
    $region2: #{_lambda_.3} parent=1 // pred_check
      _
    $region3: #{_lambda_.3} parent=1 // pred_check_branch
      %10 = sbr.rel (0) target = $region5
    $region4: #{_lambda_.3} parent=1 // pred_region
      _
    $region5: #{_lambda_.3} parent=1 // pred_fallthru
      _
    // Predicated region
    $region6: #{_lambda_.3} parent=1 // pred_check
      _
    $region7: #{_lambda_.3} parent=1 // pred_check_branch
      %12 = sbr.rel (0) target = $region9
    $region8: #{_lambda_.3} parent=1 // pred_region
      _
    $region9: #{_lambda_.3} parent=1 // pred_fallthru
      _
    // Predicated region
    $region10: #{_lambda_.3} parent=1 // pred_check
      _
    $region11: #{_lambda_.3} parent=1 // pred_check_branch
      %14 = sbr.rel (0) target = $region13
    $region12: #{_lambda_.3} parent=1 // pred_region
      _
    $region13: #{_lambda_.3} parent=1 // pred_fallthru
      _
    %v15 = vld [vmem:[%s0] sm:$0xf]
    %v16 = vunpack.c.l.bf16 %v15
    %v17 = vld [vmem:[%s1] sm:$0x1]
    %v19 = vperm.slane %v17, 0
    %v21 = vmul.f32 %v16, %v19
    %v22 = vld [vmem:[%s2] sm:$0x1]
    %v24 = vperm.slane %v22, 0
    %v26 = vadd.f32 %v21, %v24
    %27 = vst [vmem:[#allocation2] sm:$0xff] %v26
    // Predicated region
    $region14: #{_lambda_.3} parent=1 // pred_check
      _
    $region15: #{_lambda_.3} parent=1 // pred_check_branch
      %29 = sbr.rel (0) target = $region17
    $region16: #{_lambda_.3} parent=1 // pred_region
      %31 = vsyncadd [#allocation3], 0
      %s33 = sshll.u32 [#allocation2], 4
      %s34 = int_to_ptr.vmem [resolvable:$true] %s33
      %s35 = sshll.u32 %s3, 4
      %s36 = int_to_ptr.hbm [resolvable:$true] %s35
      %38 = dma.vmem_to_hbm [thread:$0]  %s34, 128, %s36, [#allocation3]
    $region17: #{_lambda_.3} parent=1 // pred_fallthru
      _
    // Predicated region
    $region18: #{_lambda_.3} parent=1 // pred_check
      _
    $region19: #{_lambda_.3} parent=1 // pred_check_branch
      %40 = sbr.rel (0) target = $region21
    $region20: #{_lambda_.3} parent=1 // pred_region
      %42 = dma.done [#allocation3], 128
    $region21: #{_lambda_.3} parent=1 // pred_fallthru
      _
    %43 = vsyncpa [#allocation3], 1

// kernel: _lambda_.2
$region0: #{_lambda_.2}
  #allocation0 [shape = 'u32[]', space=smem, size = 0x4, offset = 0x4, fixed_abs, tag = 'smem constant byte address 0x4 - core index']
  #allocation1 [shape = 'u32[72,128]{1,0:T(1,128)}', space=vmem, size = 0x9000, scoped, tag = 'internal scratch']
  %s0 = inlined_call_operand.hbm [shape: f32[8,32], index: 0, kind: input, shape index: {}]
  %s1 = inlined_call_operand.hbm [shape: bf16[32,384], index: 1, kind: input, shape index: {}]
  %s2 = inlined_call_operand.hbm [shape: f32[1,256], index: 2, kind: input, shape index: {}]
  %s3 = inlined_call_operand.vmem [shape: bf16[8,128], index: 3, kind: output, shape index: {0}]
  %s4 = inlined_call_operand.vmem [shape: f32[1,2,128], index: 4, kind: output, shape index: {1}]
  %5 = xla_tuple %s3, %s4
  %s6 = sld [smem:[#allocation0]]
  $region42: #{_lambda_.2} parent=0
    _
  %s8 = ssub.s32 1, %s6
  %s9 = scalar_select 0, %s8, %s6
  $region1: #{_lambda_.2} parent=0
    #allocation2 [shape = 'u8[4096]{0}', space=vmem, size = 0x1000, scoped, tag = 'input window, operand 0, single buffered']
    #allocation3 [shape = 's32[1]{0}', space=sflag, size = 0x4, scoped, tag = 'scoped memory for _lambda_.2']
    #allocation4 [shape = 'u8[24576]{0}', space=vmem, size = 0x6000, scoped, tag = 'input window, operand 1, single buffered']
    #allocation5 [shape = 's32[1]{0}', space=sflag, size = 0x4, scoped, tag = 'scoped memory for _lambda_.2']
    #allocation6 [shape = 'u8[1024]{0}', space=vmem, size = 0x400, scoped, tag = 'input window, operand 2, single buffered']
    %10 = vsyncpa [#allocation3], 0
    %11 = vsyncpa [#allocation5], 0
    // Predicated region
    $region2: #{_lambda_.2} parent=1 // pred_check
      _
    $region3: #{_lambda_.2} parent=1 // pred_check_branch
      %13 = sbr.rel (0) target = $region5
    $region4: #{_lambda_.2} parent=1 // pred_region
      %15 = vsyncadd [#allocation3], 0
      %s17 = sshll.u32 %s0, 4
      %s18 = int_to_ptr.hbm [resolvable:$true] %s17
      %s19 = sshll.u32 [#allocation2], 4
      %s20 = int_to_ptr.vmem [resolvable:$true] %s19
      %22 = dma.hbm_to_vmem [thread:$0]  %s18, 128, %s20, [#allocation3]
    $region5: #{_lambda_.2} parent=1 // pred_fallthru
      _
    // Predicated region
    $region6: #{_lambda_.2} parent=1 // pred_check
      _
    $region7: #{_lambda_.2} parent=1 // pred_check_branch
      %24 = sbr.rel (0) target = $region9
    $region8: #{_lambda_.2} parent=1 // pred_region
      %26 = vsyncadd [#allocation5], 0
      %s27 = sshll.u32 %s1, 4
      %s28 = int_to_ptr.hbm [resolvable:$true] %s27
      %s29 = sshll.u32 [#allocation4], 4
      %s30 = int_to_ptr.vmem [resolvable:$true] %s29
      %35 = dma.hbm_to_vmem [thread:$0]  %s28, 768, %s30, [#allocation5], 192, 192, 12
    $region9: #{_lambda_.2} parent=1 // pred_fallthru
      _
    // Predicated region
    $region10: #{_lambda_.2} parent=1 // pred_check
      _
    $region11: #{_lambda_.2} parent=1 // pred_check_branch
      %37 = sbr.rel (0) target = $region13
    $region12: #{_lambda_.2} parent=1 // pred_region
      %39 = vsyncadd [#allocation5], 0
      %s41 = sshll.u32 %s2, 4
      %s42 = int_to_ptr.hbm [resolvable:$true] %s41
      %s43 = sshll.u32 [#allocation6], 4
      %s44 = int_to_ptr.vmem [resolvable:$true] %s43
      %46 = dma.hbm_to_vmem [thread:$0]  %s42, 32, %s44, [#allocation5]
    $region13: #{_lambda_.2} parent=1 // pred_fallthru
      _
    // Predicated region
    $region14: #{_lambda_.2} parent=1 // pred_check
      _
    $region15: #{_lambda_.2} parent=1 // pred_check_branch
      %48 = sbr.rel (0) target = $region17
    $region16: #{_lambda_.2} parent=1 // pred_region
      %50 = dma.done [#allocation3], 128
    $region17: #{_lambda_.2} parent=1 // pred_fallthru
      _
    // Predicated region
    $region18: #{_lambda_.2} parent=1 // pred_check
      _
    $region19: #{_lambda_.2} parent=1 // pred_check_branch
      %52 = sbr.rel (0) target = $region21
    $region20: #{_lambda_.2} parent=1 // pred_region
      %54 = dma.done [#allocation5], 768
    $region21: #{_lambda_.2} parent=1 // pred_fallthru
      _
    // Predicated region
    $region22: #{_lambda_.2} parent=1 // pred_check
      _
    $region23: #{_lambda_.2} parent=1 // pred_check_branch
      %56 = sbr.rel (0) target = $region25
    $region24: #{_lambda_.2} parent=1 // pred_region
      %58 = dma.done [#allocation5], 32
    $region25: #{_lambda_.2} parent=1 // pred_fallthru
      _
    %v60 = vld [vmem:[#allocation2] sm:$0xff]
    %v61 = vpack.c.bf16 %v60, %v60
    %v62 = vld [vmem:[#allocation4] sm:$0xff]
    %v63 = vld [vmem:[#allocation4 + $0x8] sm:$0xf]
    %v64 = vld [vmem:[#allocation4 + $0xc] sm:$0xff]
    %v65 = vld [vmem:[#allocation4 + $0x14] sm:$0xf]
    %v66 = vld [vmem:[#allocation4 + $0x18] sm:$0xff]
    %v67 = vld [vmem:[#allocation4 + $0x20] sm:$0xf]
    %v68 = vld [vmem:[#allocation4 + $0x24] sm:$0xff]
    %v69 = vld [vmem:[#allocation4 + $0x2c] sm:$0xf]
    %v78 = vunpack.c.l.b16 %v62
    %v79 = vunpack.c.h.b16 %v62
    %v80 = vunpack.c.l.b16 %v63
    %v81 = vunpack.c.l.b16 %v64
    %v82 = vunpack.c.h.b16 %v64
    %v83 = vunpack.c.l.b16 %v65
    %v84 = vunpack.c.l.b16 %v66
    %v85 = vunpack.c.h.b16 %v66
    %v86 = vunpack.c.l.b16 %v67
    %v87 = vunpack.c.l.b16 %v68
    %v88 = vunpack.c.h.b16 %v68
    %v89 = vunpack.c.l.b16 %v69
    %v90 = vpack.c.b16 %v81, %v78
    %v91 = vpack.c.b16 %v82, %v79
    %v92 = vpack.c.b16 %v83, %v80
    %v93 = vpack.c.b16 %v87, %v84
    %v94 = vpack.c.b16 %v88, %v85
    %v95 = vpack.c.b16 %v89, %v86
    %vm102 = vcmask 261120
    %v104 = vsel %vm102, %v61, 0
    %106 = vmatpush.bf16.msra.mxu0 0
    %107 = vmatpush.bf16.msra.mxu0 0
    %108 = vmatpush.bf16.msra.mxu0 0
    %109 = vmatpush.bf16.msra.mxu0 0
    %110 = vmatpush.bf16.msra.mxu0 0
    %111 = vmatpush.bf16.msra.mxu0 0
    %112 = vmatpush.bf16.msra.mxu0 %v93
    %113 = vmatpush.bf16.msra.mxu0 %v90
    %114 = vmatmul.bf16.gmra.mxu0 %v104
    %v115 = vpop.f32.mrf.mxu0
    %v116 = vadd.f32 0.0, %v115
    %v117 = vpop.f32.mrf.mxu0
    %118 = vdwg.mxu0
    %119 = vmatpush.bf16.msra.mxu0 0
    %120 = vmatpush.bf16.msra.mxu0 0
    %121 = vmatpush.bf16.msra.mxu0 0
    %122 = vmatpush.bf16.msra.mxu0 0
    %123 = vmatpush.bf16.msra.mxu0 0
    %124 = vmatpush.bf16.msra.mxu0 0
    %125 = vmatpush.bf16.msra.mxu0 %v94
    %126 = vmatpush.bf16.msra.mxu0 %v91
    %127 = vmatmul.bf16.gmra.mxu0 %v104
    %v128 = vpop.f32.mrf.mxu0
    %v129 = vadd.f32 0.0, %v128
    %v130 = vpop.f32.mrf.mxu0
    %131 = vdwg.mxu0
    %132 = vmatpush.bf16.msra.mxu0 0
    %133 = vmatpush.bf16.msra.mxu0 0
    %134 = vmatpush.bf16.msra.mxu0 0
    %135 = vmatpush.bf16.msra.mxu0 0
    %136 = vmatpush.bf16.msra.mxu0 0
    %137 = vmatpush.bf16.msra.mxu0 0
    %138 = vmatpush.bf16.msra.mxu0 %v95
    %139 = vmatpush.bf16.msra.mxu0 %v92
    %140 = vmatmul.bf16.gmra.mxu0 %v104
    %v141 = vpop.f32.mrf.mxu0
    %v142 = vadd.f32 0.0, %v141
    %v143 = vpop.f32.mrf.mxu0
    %144 = vdwg.mxu0
    %v145 = vld [vmem:[#allocation6] sm:$0x3]
    %v147 = vperm.slane %v145, 0
    %v148 = vperm.slane %v145, 1
    %v151 = vadd.f32 %v116, %v147
    %v152 = vadd.f32 %v129, %v148
    %v153 = vxor.u32 %v152, 2147483648
    %v154 = vmul.f32 %v153, 1.442695
    %v155 = vpow.pop %v154
    %v156 = vadd.f32 %v155, 1.0
    %v157 = vrcp.pop %v156
    %v158 = vmul.f32 %v156, %v157
    %v159 = vsub.f32 1.0, %v158
    %v160 = vmul.f32 %v157, %v159
    %v161 = vadd.f32 %v157, %v160
    %vm162 = vweird.f32 %v156
    %vm163 = vweird.f32 %v157
    %vm164 = vmor %vm162, %vm163
    %v165 = vsel %vm164, %v157, %v161
    %v166 = vand.u32 2147483647, %v156
    %vm167 = vcmp.eq.f32.partialorder %v166, 8.507059e+37
    %v168 = vand.u32 %v156, 2147483648
    %v169 = vor.u32 1.1754944e-38, %v168
    %v170 = vsel %vm167, %v169, %v165
    %v171 = vmul.f32 1.0, %v170
    %v172 = vmul.f32 %v151, %v171
    %v173 = vadd.f32 %v172, %v142
    %v174 = vpack.c.bf16 %v173, %v173
    %175 = vst [vmem:[%s3] sm:$0xf] %v174
    %v176 = vrot.slane %v173, 4
    %v177 = vadd.f32 %v173, %v176
    %v178 = vrot.slane %v177, 2
    %v179 = vadd.f32 %v177, %v178
    %v180 = vrot.slane %v179, 1
    %v181 = vadd.f32 %v179, %v180
    %182 = vst [vmem:[%s4] sm:$0x1] %v181
    %v183 = vmul.f32 %v173, %v173
    %v184 = vrot.slane %v183, 4
    %v185 = vadd.f32 %v183, %v184
    %v186 = vrot.slane %v185, 2
    %v187 = vadd.f32 %v185, %v186
    %v188 = vrot.slane %v187, 1
    %v189 = vadd.f32 %v187, %v188
    %190 = vst [vmem:[%s4 + $0x1] sm:$0x1] %v189
    // Predicated region
    $region26: #{_lambda_.2} parent=1 // pred_check
      _
    $region27: #{_lambda_.2} parent=1 // pred_check_branch
      %192 = sbr.rel (0) target = $region29
    $region28: #{_lambda_.2} parent=1 // pred_region
      _
    $region29: #{_lambda_.2} parent=1 // pred_fallthru
      _
    // Predicated region
    $region30: #{_lambda_.2} parent=1 // pred_check
      _
    $region31: #{_lambda_.2} parent=1 // pred_check_branch
      %194 = sbr.rel (0) target = $region33
    $region32: #{_lambda_.2} parent=1 // pred_region
      _
    $region33: #{_lambda_.2} parent=1 // pred_fallthru
      _
    // Predicated region
    $region34: #{_lambda_.2} parent=1 // pred_check
      _
    $region35: #{_lambda_.2} parent=1 // pred_check_branch
      %196 = sbr.rel (0) target = $region37
    $region36: #{_lambda_.2} parent=1 // pred_region
      _
    $region37: #{_lambda_.2} parent=1 // pred_fallthru
      _
    // Predicated region
    $region38: #{_lambda_.2} parent=1 // pred_check
      _
    $region39: #{_lambda_.2} parent=1 // pred_check_branch
      %198 = sbr.rel (0) target = $region41
    $region40: #{_lambda_.2} parent=1 // pred_region
      _
    $region41: #{_lambda_.2} parent=1 // pred_fallthru
      _
    %199 = vsyncpa [#allocation3], 1
    %200 = vsyncpa [#allocation5], 1

</llo_original>
